<compile_context>
chip_gen: v5e
topology: v5e:2x2
jax: 0.10.0
libtpu: 0.0.40
codegen_flags: <defaults>
</compile_context>

<pallas_src>
import jax
import jax.numpy as jnp
from jax.experimental import pallas as pl
from jax.experimental.pallas import tpu as pltpu

LATENT_DIM = 64
HIDDEN = 128


def _round_up(x, m):
    return ((x + m - 1) // m) * m


def _forward_dynamics_kernel(z_ref, u_ref, w1_ref, b1_ref, w2_ref, b2_ref, o_ref):
    d = z_ref.shape[-1]
    # Fused concat: cat([z, u], 1) @ W1 == z @ W1[:d] + u @ W1[d:]
    h = jnp.dot(z_ref[...], w1_ref[:d, :], preferred_element_type=jnp.float32)
    h = h + jnp.dot(u_ref[...], w1_ref[d:, :], preferred_element_type=jnp.float32)
    h = jnp.maximum(h + b1_ref[...], 0.0)                    # bias + ReLU
    out = jnp.dot(h, w2_ref[...], preferred_element_type=jnp.float32) + b2_ref[...]
    o_ref[...] = out.astype(o_ref.dtype)


def prepare_params(params, latent_dim=LATENT_DIM):
    """One-time re-layout: keep matmul weights f32 (tiny, VMEM-resident),
    reshape biases to (1, N) rows."""
    return {
        "w1": params["w1"].astype(jnp.float32),                      # (2D, HIDDEN)
        "b1": params["b1"].reshape(1, HIDDEN).astype(jnp.float32),   # (1, HIDDEN)
        "w2": params["w2"].astype(jnp.float32),                      # (HIDDEN, D)
        "b2": params["b2"].reshape(1, latent_dim).astype(jnp.float32),
        "latent_dim": latent_dim,
    }


def _choose_tile_b(B):
    # Large batches: 2048-row tiles (amortizes ~0.35 us/step overhead) while
    # always leaving >= 2 grid steps so v7x's two TensorCores both get work.
    if B >= 4096:
        return 2048
    if B >= 16:
        return min(_round_up(pl.cdiv(B, 2), 8), 2048)
    # Tiny batch: single full-extent block (legal: block dim == array dim).
    return B


def forward_dynamics(z_t, u_latent, prepared):
    """prepared: output of prepare_params()."""
    B, D = z_t.shape
    w1, b1, w2, b2 = prepared["w1"], prepared["b1"], prepared["w2"], prepared["b2"]
    assert prepared["latent_dim"] == D
    K, H = w1.shape            # (2*D, HIDDEN); lane-dense when D == 64
    assert K == 2 * D and w2.shape == (H, D)

    z_t = z_t.astype(jnp.float32)
    u_latent = u_latent.astype(jnp.float32)

    TILE_B = _choose_tile_b(B)
    grid = (pl.cdiv(B, TILE_B),)

    flops = 2 * B * K * H + 2 * B * H * D
    bytes_accessed = (
        2 * B * D * 4            # z_t + u_latent reads (f32)
        + B * D * 4              # output writes (f32)
        + (w1.size + b1.size + w2.size + b2.size) * 4
    )

    out = pl.pallas_call(
        _forward_dynamics_kernel,
        out_shape=jax.ShapeDtypeStruct((B, D), jnp.float32),
        grid=grid,
        in_specs=[
            pl.BlockSpec((TILE_B, D), lambda i: (i, 0)),   # z_t: tiled over batch
            pl.BlockSpec((TILE_B, D), lambda i: (i, 0)),   # u_latent: tiled over batch
            pl.BlockSpec((K, H),      lambda i: (0, 0)),   # W1: resident
            pl.BlockSpec((1, H),      lambda i: (0, 0)),   # b1: resident
            pl.BlockSpec((H, D),      lambda i: (0, 0)),   # W2: resident
            pl.BlockSpec((1, D),      lambda i: (0, 0)),   # b2: resident
        ],
        out_specs=pl.BlockSpec((TILE_B, D), lambda i: (i, 0)),
        compiler_params=pltpu.CompilerParams(
            dimension_semantics=("parallel",)),            # megacore over batch
        cost_estimate=pl.CostEstimate(
            flops=flops, transcendentals=0, bytes_accessed=bytes_accessed),
    )(z_t, u_latent, w1, b1, w2, b2)

    return out.astype(z_t.dtype)


def _reference(z_t, u_latent, params):
    z_cat = jnp.concatenate([z_t, u_latent], axis=1)
    h = jnp.maximum(z_cat @ params["w1"] + params["b1"], 0.0)
    return h @ params["w2"] + params["b2"]


def init_params(key, latent_dim=LATENT_DIM):
    k1, k2, k3, k4 = jax.random.split(key, 4)
    # PyTorch-style uniform init (bound = 1/sqrt(fan_in)); (in, out) layout.
    bound1 = 1.0 / jnp.sqrt(2.0 * latent_dim)
    bound2 = 1.0 / jnp.sqrt(float(HIDDEN))
    return {
        "w1": jax.random.uniform(k1, (2 * latent_dim, HIDDEN), jnp.float32,
                                 -bound1, bound1),
        "b1": jax.random.uniform(k2, (HIDDEN,), jnp.float32, -bound1, bound1),
        "w2": jax.random.uniform(k3, (HIDDEN, latent_dim), jnp.float32,
                                 -bound2, bound2),
        "b2": jax.random.uniform(k4, (latent_dim,), jnp.float32, -bound2, bound2),
    }


if __name__ == "__main__":
    key = jax.random.PRNGKey(0)
    kp, kz, ku = jax.random.split(key, 3)

    B = 2
    params = init_params(kp, LATENT_DIM)
    prepared = prepare_params(params, LATENT_DIM)          # one-time re-layout

    z_t = jax.random.normal(kz, (B, LATENT_DIM), jnp.float32)
    u_latent = jax.random.normal(ku, (B, LATENT_DIM), jnp.float32)

    out = forward_dynamics(z_t, u_latent, prepared)
    out = jax.block_until_ready(out)

    ref = _reference(z_t, u_latent, params)
    assert out.shape == (B, LATENT_DIM)
    # f32 weights + f32 activations + f32 MXU accumulation -> tight-ish tolerance
    # (small slack for MXU bf16-multipass vs XLA default-precision reference).
    assert jnp.allclose(out, ref, atol=2e-2, rtol=2e-2), "mismatch vs reference"

    print("KERNEL_OK")
</pallas_src>

<mosaic_0001>
module attributes {stable_mosaic.version = 11 : i64} {
  func.func @_forward_dynamics_kernel(%arg0: i32, %arg1: memref<2x64xf32, #tpu.memory_space<vmem>>, %arg2: memref<2x64xf32, #tpu.memory_space<vmem>>, %arg3: memref<128x128xf32, #tpu.memory_space<vmem>>, %arg4: memref<1x128xf32, #tpu.memory_space<vmem>>, %arg5: memref<128x64xf32, #tpu.memory_space<vmem>>, %arg6: memref<1x64xf32, #tpu.memory_space<vmem>>, %arg7: memref<2x64xf32, #tpu.memory_space<vmem>>) attributes {dimension_semantics = [#tpu.dimension_semantics<parallel>], iteration_bounds = array<i64: 1>, scalar_prefetch = 0 : i64, scratch_operands = 0 : i64, tpu.core_type = #tpu.core_type<tc>, window_params = [{transform_indices = @transform_0, window_bounds = array<i64: 2, 64>}, {transform_indices = @transform_1, window_bounds = array<i64: 2, 64>}, {pipeline_mode = #tpu.pipeline_mode<synchronous>, transform_indices = @transform_2, window_bounds = array<i64: 128, 128>}, {pipeline_mode = #tpu.pipeline_mode<synchronous>, transform_indices = @transform_3, window_bounds = array<i64: 1, 128>}, {pipeline_mode = #tpu.pipeline_mode<synchronous>, transform_indices = @transform_4, window_bounds = array<i64: 128, 64>}, {pipeline_mode = #tpu.pipeline_mode<synchronous>, transform_indices = @transform_5, window_bounds = array<i64: 1, 64>}, {transform_indices = @transform_6, window_bounds = array<i64: 2, 64>}]} {
    %c0 = arith.constant 0 : index
    %c0_0 = arith.constant 0 : index
    %0 = vector.load %arg1[%c0, %c0_0] : memref<2x64xf32, #tpu.memory_space<vmem>>, vector<2x64xf32>
    %c0_1 = arith.constant 0 : index
    %c0_2 = arith.constant 0 : index
    %1 = vector.load %arg3[%c0_1, %c0_2] : memref<128x128xf32, #tpu.memory_space<vmem>>, vector<64x128xf32>
    %cst = arith.constant dense<0.000000e+00> : vector<2x128xf32>
    %2 = tpu.matmul %0, %1, %cst {dimension_numbers = #tpu.dot_dimension_numbers<[1], [0], [0], [1], [0, 0, 1, 1], [], []>} : vector<2x64xf32>, vector<64x128xf32>, vector<2x128xf32> -> vector<2x128xf32>
    %c0_3 = arith.constant 0 : index
    %c0_4 = arith.constant 0 : index
    %3 = vector.load %arg2[%c0_3, %c0_4] : memref<2x64xf32, #tpu.memory_space<vmem>>, vector<2x64xf32>
    %c64 = arith.constant 64 : index
    %c0_5 = arith.constant 0 : index
    %4 = vector.load %arg3[%c64, %c0_5] : memref<128x128xf32, #tpu.memory_space<vmem>>, vector<64x128xf32>
    %cst_6 = arith.constant dense<0.000000e+00> : vector<2x128xf32>
    %5 = tpu.matmul %3, %4, %cst_6 {dimension_numbers = #tpu.dot_dimension_numbers<[1], [0], [0], [1], [0, 0, 1, 1], [], []>} : vector<2x64xf32>, vector<64x128xf32>, vector<2x128xf32> -> vector<2x128xf32>
    %6 = arith.addf %2, %5 : vector<2x128xf32>
    %c0_7 = arith.constant 0 : index
    %c0_8 = arith.constant 0 : index
    %7 = vector.load %arg4[%c0_7, %c0_8] : memref<1x128xf32, #tpu.memory_space<vmem>>, vector<1x128xf32>
    %8 = vector.broadcast %7 : vector<1x128xf32> to vector<2x128xf32>
    %9 = arith.addf %6, %8 : vector<2x128xf32>
    %cst_9 = arith.constant 0.000000e+00 : f32
    %10 = vector.broadcast %cst_9 : f32 to vector<2x128xf32>
    %11 = arith.maximumf %9, %10 : vector<2x128xf32>
    %c0_10 = arith.constant 0 : index
    %c0_11 = arith.constant 0 : index
    %12 = vector.load %arg5[%c0_10, %c0_11] : memref<128x64xf32, #tpu.memory_space<vmem>>, vector<128x64xf32>
    %cst_12 = arith.constant dense<0.000000e+00> : vector<2x64xf32>
    %13 = tpu.matmul %11, %12, %cst_12 {dimension_numbers = #tpu.dot_dimension_numbers<[1], [0], [0], [1], [0, 0, 1, 1], [], []>} : vector<2x128xf32>, vector<128x64xf32>, vector<2x64xf32> -> vector<2x64xf32>
    %c0_13 = arith.constant 0 : index
    %c0_14 = arith.constant 0 : index
    %14 = vector.load %arg6[%c0_13, %c0_14] : memref<1x64xf32, #tpu.memory_space<vmem>>, vector<1x64xf32>
    %15 = vector.broadcast %14 : vector<1x64xf32> to vector<2x64xf32>
    %16 = arith.addf %13, %15 : vector<2x64xf32>
    %c0_15 = arith.constant 0 : index
    %c0_16 = arith.constant 0 : index
    %17 = vector.load %arg7[%c0_15, %c0_16] : memref<2x64xf32, #tpu.memory_space<vmem>>, vector<2x64xf32>
    tpu.vector_store %arg7[%c0_15, %c0_16], %16 {strides = array<i32>} : memref<2x64xf32, #tpu.memory_space<vmem>>, vector<2x64xf32>,
    return
  }
  func.func @transform_0(%arg0: i32) -> (i32, i32) {
    %c0_i32 = arith.constant 0 : i32
    %c0_i32_0 = arith.constant 0 : i32
    return %arg0, %c0_i32 : i32, i32
  }
  func.func @transform_1(%arg0: i32) -> (i32, i32) {
    %c0_i32 = arith.constant 0 : i32
    %c0_i32_0 = arith.constant 0 : i32
    return %arg0, %c0_i32 : i32, i32
  }
  func.func @transform_2(%arg0: i32) -> (i32, i32) {
    %c0_i32 = arith.constant 0 : i32
    %c0_i32_0 = arith.constant 0 : i32
    %c0_i32_1 = arith.constant 0 : i32
    return %c0_i32, %c0_i32_0 : i32, i32
  }
  func.func @transform_3(%arg0: i32) -> (i32, i32) {
    %c0_i32 = arith.constant 0 : i32
    %c0_i32_0 = arith.constant 0 : i32
    %c0_i32_1 = arith.constant 0 : i32
    return %c0_i32, %c0_i32_0 : i32, i32
  }
  func.func @transform_4(%arg0: i32) -> (i32, i32) {
    %c0_i32 = arith.constant 0 : i32
    %c0_i32_0 = arith.constant 0 : i32
    %c0_i32_1 = arith.constant 0 : i32
    return %c0_i32, %c0_i32_0 : i32, i32
  }
  func.func @transform_5(%arg0: i32) -> (i32, i32) {
    %c0_i32 = arith.constant 0 : i32
    %c0_i32_0 = arith.constant 0 : i32
    %c0_i32_1 = arith.constant 0 : i32
    return %c0_i32, %c0_i32_0 : i32, i32
  }
  func.func @transform_6(%arg0: i32) -> (i32, i32) {
    %c0_i32 = arith.constant 0 : i32
    %c0_i32_0 = arith.constant 0 : i32
    return %arg0, %c0_i32 : i32, i32
  }
}

</mosaic_0001>

<llo_original>
// kernel: tpu_custom_call.1
$region0: #{tpu_custom_call.1}
  #allocation0 [shape = 'u32[]', space=smem, size = 0x4, offset = 0x4, fixed_abs, tag = 'smem constant byte address 0x4 - core index']
  #allocation1 [shape = 'u32[72,128]{1,0:T(1,128)}', space=vmem, size = 0x9000, scoped, tag = 'internal scratch']
  %s0 = inlined_call_operand.vmem [shape: f32[2,64], index: 0, kind: input, shape index: {}]
  %s1 = inlined_call_operand.vmem [shape: f32[2,64], index: 1, kind: input, shape index: {}]
  %s2 = inlined_call_operand.vmem [shape: f32[128,128], index: 2, kind: input, shape index: {}]
  %s3 = inlined_call_operand.vmem [shape: f32[1,128], index: 3, kind: input, shape index: {}]
  %s4 = inlined_call_operand.vmem [shape: f32[128,64], index: 4, kind: input, shape index: {}]
  %s5 = inlined_call_operand.vmem [shape: f32[1,64], index: 5, kind: input, shape index: {}]
  %s6 = inlined_call_operand.hbm [shape: f32[2,64], index: 6, kind: output, shape index: {}]
  %s7 = sld [smem:[#allocation0]]
  $region34: #{tpu_custom_call.1} parent=0
    _
  %s9 = ssub.s32 1, %s7
  %s10 = scalar_select 0, %s9, %s7
  $region1: #{tpu_custom_call.1} parent=0
    #allocation2 [shape = 'u8[1024]{0}', space=vmem, size = 0x400, scoped, tag = 'output window, operand 0, single buffered']
    #allocation3 [shape = 's32[1]{0}', space=sflag, size = 0x4, scoped, tag = 'scoped memory for tpu_custom_call.1']
    %11 = vsyncpa [#allocation3], 0
    // Predicated region
    $region2: #{tpu_custom_call.1} parent=1 // pred_check
      _
    $region3: #{tpu_custom_call.1} parent=1 // pred_check_branch
      %13 = sbr.rel (0) target = $region5
    $region4: #{tpu_custom_call.1} parent=1 // pred_region
      _
    $region5: #{tpu_custom_call.1} parent=1 // pred_fallthru
      _
    // Predicated region
    $region6: #{tpu_custom_call.1} parent=1 // pred_check
      _
    $region7: #{tpu_custom_call.1} parent=1 // pred_check_branch
      %15 = sbr.rel (0) target = $region9
    $region8: #{tpu_custom_call.1} parent=1 // pred_region
      _
    $region9: #{tpu_custom_call.1} parent=1 // pred_fallthru
      _
    // Predicated region
    $region10: #{tpu_custom_call.1} parent=1 // pred_check
      _
    $region11: #{tpu_custom_call.1} parent=1 // pred_check_branch
      %17 = sbr.rel (0) target = $region13
    $region12: #{tpu_custom_call.1} parent=1 // pred_region
      _
    $region13: #{tpu_custom_call.1} parent=1 // pred_fallthru
      _
    // Predicated region
    $region14: #{tpu_custom_call.1} parent=1 // pred_check
      _
    $region15: #{tpu_custom_call.1} parent=1 // pred_check_branch
      %19 = sbr.rel (0) target = $region17
    $region16: #{tpu_custom_call.1} parent=1 // pred_region
      _
    $region17: #{tpu_custom_call.1} parent=1 // pred_fallthru
      _
    // Predicated region
    $region18: #{tpu_custom_call.1} parent=1 // pred_check
      _
    $region19: #{tpu_custom_call.1} parent=1 // pred_check_branch
      %21 = sbr.rel (0) target = $region21
    $region20: #{tpu_custom_call.1} parent=1 // pred_region
      _
    $region21: #{tpu_custom_call.1} parent=1 // pred_fallthru
      _
    // Predicated region
    $region22: #{tpu_custom_call.1} parent=1 // pred_check
      _
    $region23: #{tpu_custom_call.1} parent=1 // pred_check_branch
      %23 = sbr.rel (0) target = $region25
    $region24: #{tpu_custom_call.1} parent=1 // pred_region
      _
    $region25: #{tpu_custom_call.1} parent=1 // pred_fallthru
      _
    %v24 = vld [vmem:[%s0] sm:$0x3]
    %v25 = vld [vmem:[%s2] sm:$0xff]
    %v26 = vld [vmem:[%s2 + $0x8] sm:$0xff]
    %v27 = vld [vmem:[%s2 + $0x10] sm:$0xff]
    %v28 = vld [vmem:[%s2 + $0x18] sm:$0xff]
    %v29 = vld [vmem:[%s2 + $0x20] sm:$0xff]
    %v30 = vld [vmem:[%s2 + $0x28] sm:$0xff]
    %v31 = vld [vmem:[%s2 + $0x30] sm:$0xff]
    %v32 = vld [vmem:[%s2 + $0x38] sm:$0xff]
    %v33 = vld [vmem:[%s1] sm:$0x3]
    %v34 = vld [vmem:[%s2 + $0x40] sm:$0xff]
    %v35 = vld [vmem:[%s2 + $0x48] sm:$0xff]
    %v36 = vld [vmem:[%s2 + $0x50] sm:$0xff]
    %v37 = vld [vmem:[%s2 + $0x58] sm:$0xff]
    %v38 = vld [vmem:[%s2 + $0x60] sm:$0xff]
    %v39 = vld [vmem:[%s2 + $0x68] sm:$0xff]
    %v40 = vld [vmem:[%s2 + $0x70] sm:$0xff]
    %v41 = vld [vmem:[%s2 + $0x78] sm:$0xff]
    %vm42 = vcmask 523264
    %v44 = vsel %vm42, %v33, 0
    %46 = vmatpush.msra.mxu0 0.0
    %47 = vmatpush.msra.mxu0 0.0
    %48 = vmatpush.msra.mxu0 0.0
    %49 = vmatpush.msra.mxu0 0.0
    %50 = vmatpush.msra.mxu0 0.0
    %51 = vmatpush.msra.mxu0 0.0
    %52 = vmatpush.msra.mxu0 0.0
    %53 = vmatpush.msra.mxu0 0.0
    %54 = vmatpush.msra.mxu0 %v41
    %55 = vmatpush.msra.mxu0 %v40
    %56 = vmatpush.msra.mxu0 %v39
    %57 = vmatpush.msra.mxu0 %v38
    %58 = vmatpush.msra.mxu0 %v37
    %59 = vmatpush.msra.mxu0 %v36
    %60 = vmatpush.msra.mxu0 %v35
    %61 = vmatpush.msra.mxu0 %v34
    %62 = vmatmul.f32.gmra.mxu0 %v44
    %v63 = vpop.f32.mrf.mxu0
    %v64 = vadd.f32 0.0, %v63
    %65 = vdwg.mxu0
    %v67 = vsel %vm42, %v24, 0
    %69 = vmatpush.msra.mxu0 0.0
    %70 = vmatpush.msra.mxu0 0.0
    %71 = vmatpush.msra.mxu0 0.0
    %72 = vmatpush.msra.mxu0 0.0
    %73 = vmatpush.msra.mxu0 0.0
    %74 = vmatpush.msra.mxu0 0.0
    %75 = vmatpush.msra.mxu0 0.0
    %76 = vmatpush.msra.mxu0 0.0
    %77 = vmatpush.msra.mxu0 %v32
    %78 = vmatpush.msra.mxu0 %v31
    %79 = vmatpush.msra.mxu0 %v30
    %80 = vmatpush.msra.mxu0 %v29
    %81 = vmatpush.msra.mxu0 %v28
    %82 = vmatpush.msra.mxu0 %v27
    %83 = vmatpush.msra.mxu0 %v26
    %84 = vmatpush.msra.mxu0 %v25
    %85 = vmatmul.f32.gmra.mxu0 %v67
    %v86 = vpop.f32.mrf.mxu0
    %v87 = vadd.f32 %v64, %v86
    %88 = vdwg.mxu0
    %v89 = vld [vmem:[%s3] sm:$0x1]
    %v91 = vperm.slane %v89, 0
    %v93 = vadd.f32 %v87, %v91
    %v94 = vmax.f32 %v93, 0.0
    %v95 = vld [vmem:[%s4] sm:$0xff]
    %v96 = vld [vmem:[%s4 + $0x8] sm:$0xff]
    %v97 = vld [vmem:[%s4 + $0x10] sm:$0xff]
    %v98 = vld [vmem:[%s4 + $0x18] sm:$0xff]
    %v99 = vld [vmem:[%s4 + $0x20] sm:$0xff]
    %v100 = vld [vmem:[%s4 + $0x28] sm:$0xff]
    %v101 = vld [vmem:[%s4 + $0x30] sm:$0xff]
    %v102 = vld [vmem:[%s4 + $0x38] sm:$0xff]
    %v103 = vld [vmem:[%s4 + $0x40] sm:$0xff]
    %v104 = vld [vmem:[%s4 + $0x48] sm:$0xff]
    %v105 = vld [vmem:[%s4 + $0x50] sm:$0xff]
    %v106 = vld [vmem:[%s4 + $0x58] sm:$0xff]
    %v107 = vld [vmem:[%s4 + $0x60] sm:$0xff]
    %v108 = vld [vmem:[%s4 + $0x68] sm:$0xff]
    %v109 = vld [vmem:[%s4 + $0x70] sm:$0xff]
    %v110 = vld [vmem:[%s4 + $0x78] sm:$0xff]
    %v111 = vld [vmem:[%s5] sm:$0x1]
    %v113 = vperm.slane %v111, 0
    %115 = vmatpush.msra.mxu0 %v110
    %116 = vmatpush.msra.mxu0 %v109
    %117 = vmatpush.msra.mxu0 %v108
    %118 = vmatpush.msra.mxu0 %v107
    %119 = vmatpush.msra.mxu0 %v106
    %120 = vmatpush.msra.mxu0 %v105
    %121 = vmatpush.msra.mxu0 %v104
    %122 = vmatpush.msra.mxu0 %v103
    %123 = vmatpush.msra.mxu0 %v102
    %124 = vmatpush.msra.mxu0 %v101
    %125 = vmatpush.msra.mxu0 %v100
    %126 = vmatpush.msra.mxu0 %v99
    %127 = vmatpush.msra.mxu0 %v98
    %128 = vmatpush.msra.mxu0 %v97
    %129 = vmatpush.msra.mxu0 %v96
    %130 = vmatpush.msra.mxu0 %v95
    %131 = vmatmul.f32.gmra.mxu0 %v94
    %v132 = vpop.f32.mrf.mxu0
    %v133 = vadd.f32 %v113, %v132
    %134 = vdwg.mxu0
    %vm135 = vcmask 517120
    %136 = vst.msk [vmem:[#allocation2] sm:$0x3] %vm135, %v133
    // Predicated region
    $region26: #{tpu_custom_call.1} parent=1 // pred_check
      _
    $region27: #{tpu_custom_call.1} parent=1 // pred_check_branch
      %138 = sbr.rel (0) target = $region29
    $region28: #{tpu_custom_call.1} parent=1 // pred_region
      %140 = vsyncadd [#allocation3], 0
      %s142 = sshll.u32 [#allocation2], 4
      %s143 = int_to_ptr.vmem [resolvable:$true] %s142
      %s144 = sshll.u32 %s6, 4
      %s145 = int_to_ptr.hbm [resolvable:$true] %s144
      %147 = dma.vmem_to_hbm [thread:$0]  %s143, 32, %s145, [#allocation3]
    $region29: #{tpu_custom_call.1} parent=1 // pred_fallthru
      _
    // Predicated region
    $region30: #{tpu_custom_call.1} parent=1 // pred_check
      _
    $region31: #{tpu_custom_call.1} parent=1 // pred_check_branch
      %149 = sbr.rel (0) target = $region33
    $region32: #{tpu_custom_call.1} parent=1 // pred_region
      %151 = dma.done [#allocation3], 32
    $region33: #{tpu_custom_call.1} parent=1 // pred_fallthru
      _
    %152 = vsyncpa [#allocation3], 1

</llo_original>
